<compile_context>
chip_gen: v7x
topology: tpu7x:2x2x1
jax: 0.10.0
libtpu: 0.0.40
codegen_flags: <defaults>
</compile_context>

<pallas_src>
import functools

import jax
import jax.numpy as jnp
from jax import lax
from jax.experimental import pallas as pl
from jax.experimental.pallas import tpu as pltpu


def _feature_att_kernel(x_ref, w1_ref, b1_ref, w2_ref, b2_ref, o_ref):
    # x_ref : (bN, C, TP)  feature tile — channels on sublanes, pixels on lanes.
    # w1_ref: (C2, C)      conv1 weight with BN scale folded in.
    # b1_ref: (C2, 1)      BN shift (sublane-broadcast bias).
    # w2_ref: (C, C2)      conv2 weight.   b2_ref: (C, 1) conv2 bias.
    # o_ref : (bN, C, TP)  float32 output tile.
    w1 = w1_ref[...]
    b1 = b1_ref[...]
    w2 = w2_ref[...]
    b2 = b2_ref[...]

    def process(b):
        x = x_ref[b]  # (C, TP), native dtype — no full-tile f32 upcast.
        # BasicConv: 1x1 conv (BN scale folded) + BN shift + ReLU -> (C2, TP)
        h = jnp.dot(w1, x, preferred_element_type=jnp.float32)
        h = jnp.maximum(h + b1, 0.0)
        # second 1x1 conv with bias -> (C, TP), f32 accumulation
        att = jnp.dot(w2, h, preferred_element_type=jnp.float32) + b2
        # sigmoid(feat_att.float()) * feat  (f32, matching the PyTorch promote)
        o_ref[b] = (jax.nn.sigmoid(att) * x.astype(jnp.float32)).astype(o_ref.dtype)

    bN = x_ref.shape[0]
    if bN <= 8:
        for b in range(bN):          # short static unroll
            process(b)
    else:
        def body(b, carry):
            process(b)
            return carry
        lax.fori_loop(0, bN, body, 0)


def _pick_tiles(N, C, HW, target_bytes):
    """Pick (bN, tp) so one x tile is ~target_bytes (f32-equivalent elements)."""
    target_elems = max(1, target_bytes // 4)
    per_image = C * HW
    if per_image >= target_elems and HW > 128:
        # Large images: tile the pixel axis (multiple of 128 lanes), one image/step.
        tp = max(128, min(HW, (target_elems // C) // 128 * 128))
        return 1, int(tp)
    # Small images: keep the full pixel axis and pack several batch entries.
    bN = int(max(1, min(N, target_elems // max(per_image, 1))))
    return bN, HW


@functools.partial(jax.jit, static_argnames=("target_block_bytes",))
def feature_att(feat_nchw, w1_folded, bn_shift, w2, b2, *, target_block_bytes=4 << 20):
    """feat_nchw: (N, C, H, W).  Returns (N, C, H, W) float32 (PyTorch promotes).

    w1_folded: (C//2, C)  = bn_scale[:, None] * conv1_weight
    bn_shift:  (C//2, 1)
    w2:        (C, C//2)
    b2:        (C, 1)
    """
    N, C, H, W = feat_nchw.shape
    C2 = w1_folded.shape[0]
    HW = H * W

    bN, tp = _pick_tiles(N, C, HW, target_block_bytes)
    grid = (pl.cdiv(N, bN), pl.cdiv(HW, tp))

    # NCHW -> (N, C, HW): pure reshape, no data movement. No padding and no
    # trailing slice — partial boundary blocks are handled by Pallas (OOB
    # stores dropped; the contraction is over C only, so garbage tail lanes in
    # the last input block never pollute valid outputs).
    x = feat_nchw.reshape(N, C, HW)

    out_dtype = jnp.promote_types(feat_nchw.dtype, jnp.float32)

    out = pl.pallas_call(
        _feature_att_kernel,
        out_shape=jax.ShapeDtypeStruct((N, C, HW), out_dtype),
        grid_spec=pltpu.PrefetchScalarGridSpec(
            num_scalar_prefetch=0,
            grid=grid,
            in_specs=[
                pl.BlockSpec((bN, C, tp), lambda n, p: (n, 0, p)),  # x tile
                pl.BlockSpec((C2, C), lambda n, p: (0, 0)),         # w1 (BN-folded)
                pl.BlockSpec((C2, 1), lambda n, p: (0, 0)),         # bn shift
                pl.BlockSpec((C, C2), lambda n, p: (0, 0)),         # w2
                pl.BlockSpec((C, 1), lambda n, p: (0, 0)),          # b2
            ],
            out_specs=pl.BlockSpec((bN, C, tp), lambda n, p: (n, 0, p)),
        ),
        compiler_params=pltpu.CompilerParams(
            dimension_semantics=("parallel", "parallel"),
            # Above v5e's 16 MiB scoped default; equals v6e/v7x defaults and
            # within v7x's 64 MiB physical VMEM.
            vmem_limit_bytes=32 * 1024 * 1024,
        ),
    )(x, w1_folded, bn_shift, w2, b2)

    return out.reshape(N, C, H, W)


def _reference(feat_nchw, w1_folded, bn_shift, w2, b2):
    N, C, H, W = feat_nchw.shape
    x = feat_nchw.reshape(N, C, H * W).astype(jnp.float32)
    h = jnp.maximum(jnp.einsum("oc,ncp->nop", w1_folded, x) + bn_shift, 0.0)
    att = jnp.einsum("oc,ncp->nop", w2, h) + b2
    out = jax.nn.sigmoid(att) * x
    return out.reshape(N, C, H, W)


if __name__ == "__main__":
    # Small shapes consistent with the module (in_chan must be even).
    N, C, H, W = 2, 32, 16, 16
    C2 = C // 2

    key = jax.random.PRNGKey(0)
    k_x, k_w1, k_g, k_b, k_m, k_v, k_w2, k_b2 = jax.random.split(key, 8)

    feat = jax.random.normal(k_x, (N, C, H, W), dtype=jnp.float32)

    # Conv1 (C -> C/2, 1x1, no bias): PyTorch weight (C2, C, 1, 1) -> LHS form (C2, C).
    conv1_w = 0.1 * jax.random.normal(k_w1, (C2, C), dtype=jnp.float32)

    # BatchNorm2d(C2) inference params, folded into conv1 weight + shift.
    gamma = 1.0 + 0.1 * jax.random.normal(k_g, (C2,), dtype=jnp.float32)
    beta = 0.1 * jax.random.normal(k_b, (C2,), dtype=jnp.float32)
    r_mean = 0.1 * jax.random.normal(k_m, (C2,), dtype=jnp.float32)
    r_var = jnp.abs(jax.random.normal(k_v, (C2,), dtype=jnp.float32)) + 0.5
    eps = 1e-5
    bn_scale = gamma / jnp.sqrt(r_var + eps)                       # (C2,)
    w1_folded = bn_scale[:, None] * conv1_w                        # (C2, C)
    bn_shift = (beta - r_mean * bn_scale).reshape(C2, 1)           # (C2, 1)

    # Conv2 (C/2 -> C, 1x1, with bias): PyTorch weight (C, C2, 1, 1) -> LHS form (C, C2).
    w2 = 0.1 * jax.random.normal(k_w2, (C, C2), dtype=jnp.float32)
    b2 = 0.1 * jax.random.normal(k_b2, (C, 1), dtype=jnp.float32)

    out = feature_att(feat, w1_folded, bn_shift, w2, b2)
    out = jax.block_until_ready(out)

    ref = _reference(feat, w1_folded, bn_shift, w2, b2)
    assert out.shape == feat.shape
    assert out.dtype == jnp.float32       # matches torch's sigmoid(feat_att.float()) * feat
    assert jnp.allclose(out, ref, rtol=1e-3, atol=1e-3)

    print("KERNEL_OK")
</pallas_src>

<mosaic_0001>
module attributes {stable_mosaic.version = 11 : i64} {
  func.func @_feature_att_kernel(%arg0: i32, %arg1: i32, %arg2: memref<2x32x256xf32, #tpu.memory_space<vmem>>, %arg3: memref<16x32xf32, #tpu.memory_space<vmem>>, %arg4: memref<16x1xf32, #tpu.memory_space<vmem>>, %arg5: memref<32x16xf32, #tpu.memory_space<vmem>>, %arg6: memref<32x1xf32, #tpu.memory_space<vmem>>, %arg7: memref<2x32x256xf32, #tpu.memory_space<vmem>>) attributes {dimension_semantics = [#tpu.dimension_semantics<parallel>, #tpu.dimension_semantics<parallel>], iteration_bounds = array<i64: 1, 1>, scalar_prefetch = 0 : i64, scratch_operands = 0 : i64, tpu.core_type = #tpu.core_type<tc>, window_params = [{transform_indices = @transform_0, window_bounds = array<i64: 2, 32, 256>}, {pipeline_mode = #tpu.pipeline_mode<synchronous>, transform_indices = @transform_1, window_bounds = array<i64: 16, 32>}, {pipeline_mode = #tpu.pipeline_mode<synchronous>, transform_indices = @transform_2, window_bounds = array<i64: 16, 1>}, {pipeline_mode = #tpu.pipeline_mode<synchronous>, transform_indices = @transform_3, window_bounds = array<i64: 32, 16>}, {pipeline_mode = #tpu.pipeline_mode<synchronous>, transform_indices = @transform_4, window_bounds = array<i64: 32, 1>}, {transform_indices = @transform_5, window_bounds = array<i64: 2, 32, 256>}]} {
    %c0 = arith.constant 0 : index
    %c0_0 = arith.constant 0 : index
    %0 = vector.load %arg3[%c0, %c0_0] : memref<16x32xf32, #tpu.memory_space<vmem>>, vector<16x32xf32>
    %c0_1 = arith.constant 0 : index
    %c0_2 = arith.constant 0 : index
    %1 = vector.load %arg4[%c0_1, %c0_2] : memref<16x1xf32, #tpu.memory_space<vmem>>, vector<16x1xf32>
    %c0_3 = arith.constant 0 : index
    %c0_4 = arith.constant 0 : index
    %2 = vector.load %arg5[%c0_3, %c0_4] : memref<32x16xf32, #tpu.memory_space<vmem>>, vector<32x16xf32>
    %c0_5 = arith.constant 0 : index
    %c0_6 = arith.constant 0 : index
    %3 = vector.load %arg6[%c0_5, %c0_6] : memref<32x1xf32, #tpu.memory_space<vmem>>, vector<32x1xf32>
    %c0_7 = arith.constant 0 : index
    %c0_8 = arith.constant 0 : index
    %c0_9 = arith.constant 0 : index
    %4 = vector.load %arg2[%c0_7, %c0_8, %c0_9] : memref<2x32x256xf32, #tpu.memory_space<vmem>>, vector<1x32x256xf32>
    %5 = vector.shape_cast %4 : vector<1x32x256xf32> to vector<32x256xf32>
    %cst = arith.constant dense<0.000000e+00> : vector<16x256xf32>
    %6 = tpu.matmul %0, %5, %cst {dimension_numbers = #tpu.dot_dimension_numbers<[1], [0], [0], [1], [0, 0, 1, 1], [], []>} : vector<16x32xf32>, vector<32x256xf32>, vector<16x256xf32> -> vector<16x256xf32>
    %7 = vector.broadcast %1 : vector<16x1xf32> to vector<16x256xf32>
    %8 = arith.addf %6, %7 : vector<16x256xf32>
    %cst_10 = arith.constant 0.000000e+00 : f32
    %9 = vector.broadcast %cst_10 : f32 to vector<16x256xf32>
    %10 = arith.maximumf %8, %9 : vector<16x256xf32>
    %cst_11 = arith.constant dense<0.000000e+00> : vector<32x256xf32>
    %11 = tpu.matmul %2, %10, %cst_11 {dimension_numbers = #tpu.dot_dimension_numbers<[1], [0], [0], [1], [0, 0, 1, 1], [], []>} : vector<32x16xf32>, vector<16x256xf32>, vector<32x256xf32> -> vector<32x256xf32>
    %12 = vector.broadcast %3 : vector<32x1xf32> to vector<32x256xf32>
    %13 = arith.addf %11, %12 : vector<32x256xf32>
    %14 = arith.negf %13 : vector<32x256xf32>
    %15 = math.exp %14 : vector<32x256xf32>
    %cst_12 = arith.constant 1.000000e+00 : f32
    %16 = vector.broadcast %cst_12 : f32 to vector<32x256xf32>
    %17 = arith.addf %16, %15 : vector<32x256xf32>
    %18 = arith.divf %16, %17 : vector<32x256xf32>
    %19 = arith.mulf %18, %5 : vector<32x256xf32>
    %c0_13 = arith.constant 0 : index
    %c0_14 = arith.constant 0 : index
    %c0_15 = arith.constant 0 : index
    %20 = vector.load %arg7[%c0_13, %c0_14, %c0_15] : memref<2x32x256xf32, #tpu.memory_space<vmem>>, vector<1x32x256xf32>
    %21 = vector.shape_cast %20 : vector<1x32x256xf32> to vector<32x256xf32>
    %22 = vector.shape_cast %19 : vector<32x256xf32> to vector<1x32x256xf32>
    tpu.vector_store %arg7[%c0_13, %c0_14, %c0_15], %22 {strides = array<i32>} : memref<2x32x256xf32, #tpu.memory_space<vmem>>, vector<1x32x256xf32>,
    %c1 = arith.constant 1 : index
    %c0_16 = arith.constant 0 : index
    %c0_17 = arith.constant 0 : index
    %23 = vector.load %arg2[%c1, %c0_16, %c0_17] : memref<2x32x256xf32, #tpu.memory_space<vmem>>, vector<1x32x256xf32>
    %24 = vector.shape_cast %23 : vector<1x32x256xf32> to vector<32x256xf32>
    %cst_18 = arith.constant dense<0.000000e+00> : vector<16x256xf32>
    %25 = tpu.matmul %0, %24, %cst_18 {dimension_numbers = #tpu.dot_dimension_numbers<[1], [0], [0], [1], [0, 0, 1, 1], [], []>} : vector<16x32xf32>, vector<32x256xf32>, vector<16x256xf32> -> vector<16x256xf32>
    %26 = vector.broadcast %1 : vector<16x1xf32> to vector<16x256xf32>
    %27 = arith.addf %25, %26 : vector<16x256xf32>
    %cst_19 = arith.constant 0.000000e+00 : f32
    %28 = vector.broadcast %cst_19 : f32 to vector<16x256xf32>
    %29 = arith.maximumf %27, %28 : vector<16x256xf32>
    %cst_20 = arith.constant dense<0.000000e+00> : vector<32x256xf32>
    %30 = tpu.matmul %2, %29, %cst_20 {dimension_numbers = #tpu.dot_dimension_numbers<[1], [0], [0], [1], [0, 0, 1, 1], [], []>} : vector<32x16xf32>, vector<16x256xf32>, vector<32x256xf32> -> vector<32x256xf32>
    %31 = vector.broadcast %3 : vector<32x1xf32> to vector<32x256xf32>
    %32 = arith.addf %30, %31 : vector<32x256xf32>
    %33 = arith.negf %32 : vector<32x256xf32>
    %34 = math.exp %33 : vector<32x256xf32>
    %cst_21 = arith.constant 1.000000e+00 : f32
    %35 = vector.broadcast %cst_21 : f32 to vector<32x256xf32>
    %36 = arith.addf %35, %34 : vector<32x256xf32>
    %37 = arith.divf %35, %36 : vector<32x256xf32>
    %38 = arith.mulf %37, %24 : vector<32x256xf32>
    %c1_22 = arith.constant 1 : index
    %c0_23 = arith.constant 0 : index
    %c0_24 = arith.constant 0 : index
    %39 = vector.load %arg7[%c1_22, %c0_23, %c0_24] : memref<2x32x256xf32, #tpu.memory_space<vmem>>, vector<1x32x256xf32>
    %40 = vector.shape_cast %39 : vector<1x32x256xf32> to vector<32x256xf32>
    %41 = vector.shape_cast %38 : vector<32x256xf32> to vector<1x32x256xf32>
    tpu.vector_store %arg7[%c1_22, %c0_23, %c0_24], %41 {strides = array<i32>} : memref<2x32x256xf32, #tpu.memory_space<vmem>>, vector<1x32x256xf32>,
    return
  }
  func.func @transform_0(%arg0: i32, %arg1: i32) -> (i32, i32, i32) {
    %c0_i32 = arith.constant 0 : i32
    %c0_i32_0 = arith.constant 0 : i32
    return %arg0, %c0_i32, %arg1 : i32, i32, i32
  }
  func.func @transform_1(%arg0: i32, %arg1: i32) -> (i32, i32) {
    %c0_i32 = arith.constant 0 : i32
    %c0_i32_0 = arith.constant 0 : i32
    %c0_i32_1 = arith.constant 0 : i32
    return %c0_i32, %c0_i32_0 : i32, i32
  }
  func.func @transform_2(%arg0: i32, %arg1: i32) -> (i32, i32) {
    %c0_i32 = arith.constant 0 : i32
    %c0_i32_0 = arith.constant 0 : i32
    %c0_i32_1 = arith.constant 0 : i32
    return %c0_i32, %c0_i32_0 : i32, i32
  }
  func.func @transform_3(%arg0: i32, %arg1: i32) -> (i32, i32) {
    %c0_i32 = arith.constant 0 : i32
    %c0_i32_0 = arith.constant 0 : i32
    %c0_i32_1 = arith.constant 0 : i32
    return %c0_i32, %c0_i32_0 : i32, i32
  }
  func.func @transform_4(%arg0: i32, %arg1: i32) -> (i32, i32) {
    %c0_i32 = arith.constant 0 : i32
    %c0_i32_0 = arith.constant 0 : i32
    %c0_i32_1 = arith.constant 0 : i32
    return %c0_i32, %c0_i32_0 : i32, i32
  }
  func.func @transform_5(%arg0: i32, %arg1: i32) -> (i32, i32, i32) {
    %c0_i32 = arith.constant 0 : i32
    %c0_i32_0 = arith.constant 0 : i32
    return %arg0, %c0_i32, %arg1 : i32, i32, i32
  }
}

</mosaic_0001>

<llo_original>
// kernel: feature_att.1
$region0: #{feature_att.1}
  #allocation0 [shape = 'u32[]', space=smem, size = 0x4, offset = 0x4, fixed_abs, tag = 'smem constant byte address 0x4 - core index']
  #allocation1 [shape = 'u32[144,128]{1,0:T(1,128)}', space=vmem, size = 0x12000, scoped, tag = 'internal scratch']
  %s0 = inlined_call_operand.vmem [shape: f32[2,32,256], index: 0, kind: input, shape index: {}]
  %s1 = inlined_call_operand.vmem [shape: f32[16,32], index: 1, kind: input, shape index: {}]
  %s2 = inlined_call_operand.vmem [shape: f32[16,1], index: 2, kind: input, shape index: {}]
  %s3 = inlined_call_operand.vmem [shape: f32[32,16], index: 3, kind: input, shape index: {}]
  %s4 = inlined_call_operand.vmem [shape: f32[32,1], index: 4, kind: input, shape index: {}]
  %s5 = inlined_call_operand.vmem [shape: f32[2,32,256], index: 5, kind: output, shape index: {}]
  %s6 = sld [smem:[#allocation0]]
  $region30: #{feature_att.1} parent=0
    _
  %s8 = ssub.s32 1, %s6
  %s9 = scalar_select 0, %s8, %s6
  // Predicated region
  $region2: #{feature_att.1} parent=0 // pred_check
    _
  $region3: #{feature_att.1} parent=0 // pred_check_branch
    %11 = sbr.rel (0) target = $region5
  $region4: #{feature_att.1} parent=0 // pred_region
    _
  $region5: #{feature_att.1} parent=0 // pred_fallthru
    _
  // Predicated region
  $region6: #{feature_att.1} parent=0 // pred_check
    _
  $region7: #{feature_att.1} parent=0 // pred_check_branch
    %13 = sbr.rel (0) target = $region9
  $region8: #{feature_att.1} parent=0 // pred_region
    _
  $region9: #{feature_att.1} parent=0 // pred_fallthru
    _
  // Predicated region
  $region10: #{feature_att.1} parent=0 // pred_check
    _
  $region11: #{feature_att.1} parent=0 // pred_check_branch
    %15 = sbr.rel (0) target = $region13
  $region12: #{feature_att.1} parent=0 // pred_region
    _
  $region13: #{feature_att.1} parent=0 // pred_fallthru
    _
  // Predicated region
  $region14: #{feature_att.1} parent=0 // pred_check
    _
  $region15: #{feature_att.1} parent=0 // pred_check_branch
    %17 = sbr.rel (0) target = $region17
  $region16: #{feature_att.1} parent=0 // pred_region
    _
  $region17: #{feature_att.1} parent=0 // pred_fallthru
    _
  // Predicated region
  $region18: #{feature_att.1} parent=0 // pred_check
    _
  $region19: #{feature_att.1} parent=0 // pred_check_branch
    %19 = sbr.rel (0) target = $region21
  $region20: #{feature_att.1} parent=0 // pred_region
    _
  $region21: #{feature_att.1} parent=0 // pred_fallthru
    _
  %v20 = vld [vmem:[%s1] sm:$0xff]
  %v21 = vld [vmem:[%s1 + $0x8] sm:$0xff]
  %v22 = vld [vmem:[%s2] sm:$0xff]
  %v23 = vld [vmem:[%s2 + $0x8] sm:$0xff]
  %v24 = vld [vmem:[%s3] sm:$0xff]
  %v25 = vld [vmem:[%s3 + $0x8] sm:$0xff]
  %v26 = vld [vmem:[%s3 + $0x10] sm:$0xff]
  %v27 = vld [vmem:[%s3 + $0x18] sm:$0xff]
  %v28 = vld [vmem:[%s4] sm:$0xff]
  %v29 = vld [vmem:[%s4 + $0x8] sm:$0xff]
  %v30 = vld [vmem:[%s4 + $0x10] sm:$0xff]
  %v31 = vld [vmem:[%s4 + $0x18] sm:$0xff]
  %v32 = vld [vmem:[%s0] sm:$0xff]
  %v33 = vld [vmem:[%s0 + $0x8] sm:$0xff]
  %v34 = vld [vmem:[%s0 + $0x10] sm:$0xff]
  %v35 = vld [vmem:[%s0 + $0x18] sm:$0xff]
  %v36 = vld [vmem:[%s0 + $0x20] sm:$0xff]
  %v37 = vld [vmem:[%s0 + $0x28] sm:$0xff]
  %v38 = vld [vmem:[%s0 + $0x30] sm:$0xff]
  %v39 = vld [vmem:[%s0 + $0x38] sm:$0xff]
  %41 = vset.pattern.permute.xlu0 0
  %42 = vperm.xlu0 %41, %v22
  %v43 = vpop.permute.xlu0 %42
  %46 = vset.pattern.permute.xlu0 0
  %47 = vperm.xlu0 %46, %v23
  %v48 = vpop.permute.xlu0 %47
  %vm50 = vcmask 261120
  %v52 = vsel %vm50, %v20, 0
  %v55 = vsel %vm50, %v21, 0
  %57 = vmatprep.subr.mxu0 %v33
  %58 = vmatpush1.msra.mxu0 %v32
  %59 = vmatprep.subr.mxu0 %v35
  %60 = vmatpush1.msra.mxu0 %v34
  %61 = vmatprep.subr.mxu0 %v37
  %62 = vmatpush1.msra.mxu0 %v36
  %63 = vmatprep.subr.mxu0 %v39
  %64 = vmatpush1.msra.mxu0 %v38
  %65 = vmatprep.subr.mxu0 0.0
  %66 = vmatpush1.msra.mxu0 0.0
  %67 = vmatprep.subr.mxu0 0.0
  %68 = vmatpush1.msra.mxu0 0.0
  %69 = vmatprep.subr.mxu0 0.0
  %70 = vmatpush1.msra.mxu0 0.0
  %71 = vmatprep.subr.mxu0 0.0
  %72 = vmatpush1.msra.mxu0 0.0
  %73 = vmatprep.subr.mxu0 0.0
  %74 = vmatpush1.msra.mxu0 0.0
  %75 = vmatprep.subr.mxu0 0.0
  %76 = vmatpush1.msra.mxu0 0.0
  %77 = vmatprep.subr.mxu0 0.0
  %78 = vmatpush1.msra.mxu0 0.0
  %79 = vmatprep.subr.mxu0 0.0
  %80 = vmatpush1.msra.mxu0 0.0
  %81 = vmatprep.subr.mxu0 0.0
  %82 = vmatpush1.msra.mxu0 0.0
  %83 = vmatprep.subr.mxu0 0.0
  %84 = vmatpush1.msra.mxu0 0.0
  %85 = vmatprep.subr.mxu0 0.0
  %86 = vmatpush1.msra.mxu0 0.0
  %87 = vmatprep.subr.mxu0 0.0
  %88 = vmatpush1.msra.mxu0 0.0
  %89 = vmatprep.subr.mxu0 0.0
  %90 = vmatpush1.msra.mxu0 0.0
  %91 = vmatprep.subr.mxu0 0.0
  %92 = vmatpush1.msra.mxu0 0.0
  %93 = vmatprep.subr.mxu0 0.0
  %94 = vmatpush1.msra.mxu0 0.0
  %95 = vmatprep.subr.mxu0 0.0
  %96 = vmatpush1.msra.mxu0 0.0
  %97 = vmatprep.subr.mxu0 0.0
  %98 = vmatpush1.msra.mxu0 0.0
  %99 = vmatprep.subr.mxu0 0.0
  %100 = vmatpush1.msra.mxu0 0.0
  %101 = vmatprep.subr.mxu0 0.0
  %102 = vmatpush1.msra.mxu0 0.0
  %103 = vmatprep.subr.mxu0 0.0
  %104 = vmatpush1.msra.mxu0 0.0
  %105 = vmatprep.subr.mxu0 0.0
  %106 = vmatpush1.msra.mxu0 0.0
  %107 = vmatprep.subr.mxu0 0.0
  %108 = vmatpush1.msra.mxu0 0.0
  %109 = vmatprep.subr.mxu0 0.0
  %110 = vmatpush1.msra.mxu0 0.0
  %111 = vmatprep.subr.mxu0 0.0
  %112 = vmatpush1.msra.mxu0 0.0
  %113 = vmatprep.subr.mxu0 0.0
  %114 = vmatpush1.msra.mxu0 0.0
  %115 = vmatprep.subr.mxu0 0.0
  %116 = vmatpush1.msra.mxu0 0.0
  %117 = vmatprep.subr.mxu0 0.0
  %118 = vmatpush1.msra.mxu0 0.0
  %119 = vmatprep.subr.mxu0 0.0
  %120 = vmatpush1.msra.mxu0 0.0
  %121 = vmatprep.mubr.f32.mxu0 0.0
  %122 = vmatmul.mubr.f32.gmra.mrb[0].mxu0 %v52
  %v123 = vpop.f32.mrb[0].mxu0
  %v124 = vadd.f32 %v43, %v123
  %v125 = vpop.f32.mrb[0].mxu0
  %v126 = vadd.f32 %v43, %v125
  %127 = vmatprep.mubr.f32.mxu0 0.0
  %128 = vmatmul.mubr.f32.gmra.mrb[0].mxu0 %v55
  %v129 = vpop.f32.mrb[0].mxu0
  %v130 = vadd.f32 %v48, %v129
  %v131 = vpop.f32.mrb[0].mxu0
  %v132 = vadd.f32 %v48, %v131
  %133 = vdwg.mxu0
  %v134 = vmax.f32 %v124, 0.0
  %v135 = vmax.f32 %v126, 0.0
  %v136 = vmax.f32 %v130, 0.0
  %v137 = vmax.f32 %v132, 0.0
  %139 = vset.pattern.permute.xlu0 0
  %140 = vperm.xlu0 %139, %v28
  %v141 = vpop.permute.xlu0 %140
  %144 = vset.pattern.permute.xlu0 0
  %145 = vperm.xlu0 %144, %v29
  %v146 = vpop.permute.xlu0 %145
  %149 = vset.pattern.permute.xlu0 0
  %150 = vperm.xlu0 %149, %v30
  %v151 = vpop.permute.xlu0 %150
  %154 = vset.pattern.permute.xlu0 0
  %155 = vperm.xlu0 %154, %v31
  %v156 = vpop.permute.xlu0 %155
  %vm158 = vcmask 130048
  %v160 = vsel %vm158, %v24, 0
  %v163 = vsel %vm158, %v25, 0
  %v166 = vsel %vm158, %v26, 0
  %v169 = vsel %vm158, %v27, 0
  %171 = vmatprep.subr.mxu0 %v135
  %172 = vmatpush1.msra.mxu0 %v134
  %173 = vmatprep.subr.mxu0 %v137
  %174 = vmatpush1.msra.mxu0 %v136
  %175 = vmatprep.subr.mxu0 0.0
  %176 = vmatpush1.msra.mxu0 0.0
  %177 = vmatprep.subr.mxu0 0.0
  %178 = vmatpush1.msra.mxu0 0.0
  %179 = vmatprep.subr.mxu0 0.0
  %180 = vmatpush1.msra.mxu0 0.0
  %181 = vmatprep.subr.mxu0 0.0
  %182 = vmatpush1.msra.mxu0 0.0
  %183 = vmatprep.subr.mxu0 0.0
  %184 = vmatpush1.msra.mxu0 0.0
  %185 = vmatprep.subr.mxu0 0.0
  %186 = vmatpush1.msra.mxu0 0.0
  %187 = vmatprep.subr.mxu0 0.0
  %188 = vmatpush1.msra.mxu0 0.0
  %189 = vmatprep.subr.mxu0 0.0
  %190 = vmatpush1.msra.mxu0 0.0
  %191 = vmatprep.subr.mxu0 0.0
  %192 = vmatpush1.msra.mxu0 0.0
  %193 = vmatprep.subr.mxu0 0.0
  %194 = vmatpush1.msra.mxu0 0.0
  %195 = vmatprep.subr.mxu0 0.0
  %196 = vmatpush1.msra.mxu0 0.0
  %197 = vmatprep.subr.mxu0 0.0
  %198 = vmatpush1.msra.mxu0 0.0
  %199 = vmatprep.subr.mxu0 0.0
  %200 = vmatpush1.msra.mxu0 0.0
  %201 = vmatprep.subr.mxu0 0.0
  %202 = vmatpush1.msra.mxu0 0.0
  %203 = vmatprep.subr.mxu0 0.0
  %204 = vmatpush1.msra.mxu0 0.0
  %205 = vmatprep.subr.mxu0 0.0
  %206 = vmatpush1.msra.mxu0 0.0
  %207 = vmatprep.subr.mxu0 0.0
  %208 = vmatpush1.msra.mxu0 0.0
  %209 = vmatprep.subr.mxu0 0.0
  %210 = vmatpush1.msra.mxu0 0.0
  %211 = vmatprep.subr.mxu0 0.0
  %212 = vmatpush1.msra.mxu0 0.0
  %213 = vmatprep.subr.mxu0 0.0
  %214 = vmatpush1.msra.mxu0 0.0
  %215 = vmatprep.subr.mxu0 0.0
  %216 = vmatpush1.msra.mxu0 0.0
  %217 = vmatprep.subr.mxu0 0.0
  %218 = vmatpush1.msra.mxu0 0.0
  %219 = vmatprep.subr.mxu0 0.0
  %220 = vmatpush1.msra.mxu0 0.0
  %221 = vmatprep.subr.mxu0 0.0
  %222 = vmatpush1.msra.mxu0 0.0
  %223 = vmatprep.subr.mxu0 0.0
  %224 = vmatpush1.msra.mxu0 0.0
  %225 = vmatprep.subr.mxu0 0.0
  %226 = vmatpush1.msra.mxu0 0.0
  %227 = vmatprep.subr.mxu0 0.0
  %228 = vmatpush1.msra.mxu0 0.0
  %229 = vmatprep.subr.mxu0 0.0
  %230 = vmatpush1.msra.mxu0 0.0
  %231 = vmatprep.subr.mxu0 0.0
  %232 = vmatpush1.msra.mxu0 0.0
  %233 = vmatprep.subr.mxu0 0.0
  %234 = vmatpush1.msra.mxu0 0.0
  %235 = vmatprep.mubr.f32.mxu0 0.0
  %236 = vmatmul.mubr.f32.gmra.mrb[0].mxu0 %v160
  %v237 = vpop.f32.mrb[0].mxu0
  %v238 = vadd.f32 %v141, %v237
  %v239 = vpop.f32.mrb[0].mxu0
  %v240 = vadd.f32 %v141, %v239
  %241 = vmatprep.mubr.f32.mxu0 0.0
  %242 = vmatmul.mubr.f32.gmra.mrb[0].mxu0 %v163
  %v243 = vpop.f32.mrb[0].mxu0
  %v244 = vadd.f32 %v146, %v243
  %v245 = vpop.f32.mrb[0].mxu0
  %v246 = vadd.f32 %v146, %v245
  %247 = vmatprep.mubr.f32.mxu0 0.0
  %248 = vmatmul.mubr.f32.gmra.mrb[0].mxu0 %v166
  %v249 = vpop.f32.mrb[0].mxu0
  %v250 = vadd.f32 %v151, %v249
  %v251 = vpop.f32.mrb[0].mxu0
  %v252 = vadd.f32 %v151, %v251
  %253 = vmatprep.mubr.f32.mxu0 0.0
  %254 = vmatmul.mubr.f32.gmra.mrb[0].mxu0 %v169
  %v255 = vpop.f32.mrb[0].mxu0
  %v256 = vadd.f32 %v156, %v255
  %v257 = vpop.f32.mrb[0].mxu0
  %v258 = vadd.f32 %v156, %v257
  %259 = vdwg.mxu0
  %v260 = vxor.u32 %v238, 2147483648
  %v261 = vxor.u32 %v240, 2147483648
  %v262 = vxor.u32 %v244, 2147483648
  %v263 = vxor.u32 %v246, 2147483648
  %v264 = vxor.u32 %v250, 2147483648
  %v265 = vxor.u32 %v252, 2147483648
  %v266 = vxor.u32 %v256, 2147483648
  %v267 = vxor.u32 %v258, 2147483648
  %v268 = vmul.f32 %v260, 1.442695
  %v269 = vpow.pop %v268
  %v270 = vmul.f32 %v261, 1.442695
  %v271 = vpow.pop %v270
  %v272 = vmul.f32 %v262, 1.442695
  %v273 = vpow.pop %v272
  %v274 = vmul.f32 %v263, 1.442695
  %v275 = vpow.pop %v274
  %v276 = vmul.f32 %v264, 1.442695
  %v277 = vpow.pop %v276
  %v278 = vmul.f32 %v265, 1.442695
  %v279 = vpow.pop %v278
  %v280 = vmul.f32 %v266, 1.442695
  %v281 = vpow.pop %v280
  %v282 = vmul.f32 %v267, 1.442695
  %v283 = vpow.pop %v282
  %v284 = vadd.f32 %v269, 1.0
  %v285 = vadd.f32 %v271, 1.0
  %v286 = vadd.f32 %v273, 1.0
  %v287 = vadd.f32 %v275, 1.0
  %v288 = vadd.f32 %v277, 1.0
  %v289 = vadd.f32 %v279, 1.0
  %v290 = vadd.f32 %v281, 1.0
  %v291 = vadd.f32 %v283, 1.0
  %v292 = vrcp.pop %v284
  %v293 = vmul.f32 1.0, %v292
  %v294 = vrcp.pop %v285
  %v295 = vmul.f32 1.0, %v294
  %v296 = vrcp.pop %v286
  %v297 = vmul.f32 1.0, %v296
  %v298 = vrcp.pop %v287
  %v299 = vmul.f32 1.0, %v298
  %v300 = vrcp.pop %v288
  %v301 = vmul.f32 1.0, %v300
  %v302 = vrcp.pop %v289
  %v303 = vmul.f32 1.0, %v302
  %v304 = vrcp.pop %v290
  %v305 = vmul.f32 1.0, %v304
  %v306 = vrcp.pop %v291
  %v307 = vmul.f32 1.0, %v306
  %v308 = vmul.f32 %v293, %v32
  %v309 = vmul.f32 %v295, %v33
  %v310 = vmul.f32 %v297, %v34
  %v311 = vmul.f32 %v299, %v35
  %v312 = vmul.f32 %v301, %v36
  %v313 = vmul.f32 %v303, %v37
  %v314 = vmul.f32 %v305, %v38
  %v315 = vmul.f32 %v307, %v39
  %316 = vst [vmem:[%s5] sm:$0xff] %v308
  %317 = vst [vmem:[%s5 + $0x8] sm:$0xff] %v309
  %318 = vst [vmem:[%s5 + $0x10] sm:$0xff] %v310
  %319 = vst [vmem:[%s5 + $0x18] sm:$0xff] %v311
  %320 = vst [vmem:[%s5 + $0x20] sm:$0xff] %v312
  %321 = vst [vmem:[%s5 + $0x28] sm:$0xff] %v313
  %322 = vst [vmem:[%s5 + $0x30] sm:$0xff] %v314
  %323 = vst [vmem:[%s5 + $0x38] sm:$0xff] %v315
  %s324 = scalar_lea.vmem %s0, 64
  %v325 = vld [vmem:[%s324] sm:$0xff]
  %v326 = vld [vmem:[%s324 + $0x8] sm:$0xff]
  %v327 = vld [vmem:[%s324 + $0x10] sm:$0xff]
  %v328 = vld [vmem:[%s324 + $0x18] sm:$0xff]
  %v329 = vld [vmem:[%s324 + $0x20] sm:$0xff]
  %v330 = vld [vmem:[%s324 + $0x28] sm:$0xff]
  %v331 = vld [vmem:[%s324 + $0x30] sm:$0xff]
  %v332 = vld [vmem:[%s324 + $0x38] sm:$0xff]
  %333 = vmatprep.subr.mxu0 %v326
  %334 = vmatpush1.msra.mxu0 %v325
  %335 = vmatprep.subr.mxu0 %v328
  %336 = vmatpush1.msra.mxu0 %v327
  %337 = vmatprep.subr.mxu0 %v330
  %338 = vmatpush1.msra.mxu0 %v329
  %339 = vmatprep.subr.mxu0 %v332
  %340 = vmatpush1.msra.mxu0 %v331
  %341 = vmatprep.subr.mxu0 0.0
  %342 = vmatpush1.msra.mxu0 0.0
  %343 = vmatprep.subr.mxu0 0.0
  %344 = vmatpush1.msra.mxu0 0.0
  %345 = vmatprep.subr.mxu0 0.0
  %346 = vmatpush1.msra.mxu0 0.0
  %347 = vmatprep.subr.mxu0 0.0
  %348 = vmatpush1.msra.mxu0 0.0
  %349 = vmatprep.subr.mxu0 0.0
  %350 = vmatpush1.msra.mxu0 0.0
  %351 = vmatprep.subr.mxu0 0.0
  %352 = vmatpush1.msra.mxu0 0.0
  %353 = vmatprep.subr.mxu0 0.0
  %354 = vmatpush1.msra.mxu0 0.0
  %355 = vmatprep.subr.mxu0 0.0
  %356 = vmatpush1.msra.mxu0 0.0
  %357 = vmatprep.subr.mxu0 0.0
  %358 = vmatpush1.msra.mxu0 0.0
  %359 = vmatprep.subr.mxu0 0.0
  %360 = vmatpush1.msra.mxu0 0.0
  %361 = vmatprep.subr.mxu0 0.0
  %362 = vmatpush1.msra.mxu0 0.0
  %363 = vmatprep.subr.mxu0 0.0
  %364 = vmatpush1.msra.mxu0 0.0
  %365 = vmatprep.subr.mxu0 0.0
  %366 = vmatpush1.msra.mxu0 0.0
  %367 = vmatprep.subr.mxu0 0.0
  %368 = vmatpush1.msra.mxu0 0.0
  %369 = vmatprep.subr.mxu0 0.0
  %370 = vmatpush1.msra.mxu0 0.0
  %371 = vmatprep.subr.mxu0 0.0
  %372 = vmatpush1.msra.mxu0 0.0
  %373 = vmatprep.subr.mxu0 0.0
  %374 = vmatpush1.msra.mxu0 0.0
  %375 = vmatprep.subr.mxu0 0.0
  %376 = vmatpush1.msra.mxu0 0.0
  %377 = vmatprep.subr.mxu0 0.0
  %378 = vmatpush1.msra.mxu0 0.0
  %379 = vmatprep.subr.mxu0 0.0
  %380 = vmatpush1.msra.mxu0 0.0
  %381 = vmatprep.subr.mxu0 0.0
  %382 = vmatpush1.msra.mxu0 0.0
  %383 = vmatprep.subr.mxu0 0.0
  %384 = vmatpush1.msra.mxu0 0.0
  %385 = vmatprep.subr.mxu0 0.0
  %386 = vmatpush1.msra.mxu0 0.0
  %387 = vmatprep.subr.mxu0 0.0
  %388 = vmatpush1.msra.mxu0 0.0
  %389 = vmatprep.subr.mxu0 0.0
  %390 = vmatpush1.msra.mxu0 0.0
  %391 = vmatprep.subr.mxu0 0.0
  %392 = vmatpush1.msra.mxu0 0.0
  %393 = vmatprep.subr.mxu0 0.0
  %394 = vmatpush1.msra.mxu0 0.0
  %395 = vmatprep.subr.mxu0 0.0
  %396 = vmatpush1.msra.mxu0 0.0
  %397 = vmatprep.mubr.f32.mxu0 0.0
  %398 = vmatmul.mubr.f32.gmra.mrb[0].mxu0 %v52
  %v399 = vpop.f32.mrb[0].mxu0
  %v400 = vadd.f32 %v43, %v399
  %v401 = vpop.f32.mrb[0].mxu0
  %v402 = vadd.f32 %v43, %v401
  %403 = vmatprep.mubr.f32.mxu0 0.0
  %404 = vmatmul.mubr.f32.gmra.mrb[0].mxu0 %v55
  %v405 = vpop.f32.mrb[0].mxu0
  %v406 = vadd.f32 %v48, %v405
  %v407 = vpop.f32.mrb[0].mxu0
  %v408 = vadd.f32 %v48, %v407
  %409 = vdwg.mxu0
  %v410 = vmax.f32 %v400, 0.0
  %v411 = vmax.f32 %v402, 0.0
  %v412 = vmax.f32 %v406, 0.0
  %v413 = vmax.f32 %v408, 0.0
  %414 = vmatprep.subr.mxu0 %v411
  %415 = vmatpush1.msra.mxu0 %v410
  %416 = vmatprep.subr.mxu0 %v413
  %417 = vmatpush1.msra.mxu0 %v412
  %418 = vmatprep.subr.mxu0 0.0
  %419 = vmatpush1.msra.mxu0 0.0
  %420 = vmatprep.subr.mxu0 0.0
  %421 = vmatpush1.msra.mxu0 0.0
  %422 = vmatprep.subr.mxu0 0.0
  %423 = vmatpush1.msra.mxu0 0.0
  %424 = vmatprep.subr.mxu0 0.0
  %425 = vmatpush1.msra.mxu0 0.0
  %426 = vmatprep.subr.mxu0 0.0
  %427 = vmatpush1.msra.mxu0 0.0
  %428 = vmatprep.subr.mxu0 0.0
  %429 = vmatpush1.msra.mxu0 0.0
  %430 = vmatprep.subr.mxu0 0.0
  %431 = vmatpush1.msra.mxu0 0.0
  %432 = vmatprep.subr.mxu0 0.0
  %433 = vmatpush1.msra.mxu0 0.0
  %434 = vmatprep.subr.mxu0 0.0
  %435 = vmatpush1.msra.mxu0 0.0
  %436 = vmatprep.subr.mxu0 0.0
  %437 = vmatpush1.msra.mxu0 0.0
  %438 = vmatprep.subr.mxu0 0.0
  %439 = vmatpush1.msra.mxu0 0.0
  %440 = vmatprep.subr.mxu0 0.0
  %441 = vmatpush1.msra.mxu0 0.0
  %442 = vmatprep.subr.mxu0 0.0
  %443 = vmatpush1.msra.mxu0 0.0
  %444 = vmatprep.subr.mxu0 0.0
  %445 = vmatpush1.msra.mxu0 0.0
  %446 = vmatprep.subr.mxu0 0.0
  %447 = vmatpush1.msra.mxu0 0.0
  %448 = vmatprep.subr.mxu0 0.0
  %449 = vmatpush1.msra.mxu0 0.0
  %450 = vmatprep.subr.mxu0 0.0
  %451 = vmatpush1.msra.mxu0 0.0
  %452 = vmatprep.subr.mxu0 0.0
  %453 = vmatpush1.msra.mxu0 0.0
  %454 = vmatprep.subr.mxu0 0.0
  %455 = vmatpush1.msra.mxu0 0.0
  %456 = vmatprep.subr.mxu0 0.0
  %457 = vmatpush1.msra.mxu0 0.0
  %458 = vmatprep.subr.mxu0 0.0
  %459 = vmatpush1.msra.mxu0 0.0
  %460 = vmatprep.subr.mxu0 0.0
  %461 = vmatpush1.msra.mxu0 0.0
  %462 = vmatprep.subr.mxu0 0.0
  %463 = vmatpush1.msra.mxu0 0.0
  %464 = vmatprep.subr.mxu0 0.0
  %465 = vmatpush1.msra.mxu0 0.0
  %466 = vmatprep.subr.mxu0 0.0
  %467 = vmatpush1.msra.mxu0 0.0
  %468 = vmatprep.subr.mxu0 0.0
  %469 = vmatpush1.msra.mxu0 0.0
  %470 = vmatprep.subr.mxu0 0.0
  %471 = vmatpush1.msra.mxu0 0.0
  %472 = vmatprep.subr.mxu0 0.0
  %473 = vmatpush1.msra.mxu0 0.0
  %474 = vmatprep.subr.mxu0 0.0
  %475 = vmatpush1.msra.mxu0 0.0
  %476 = vmatprep.subr.mxu0 0.0
  %477 = vmatpush1.msra.mxu0 0.0
  %478 = vmatprep.mubr.f32.mxu0 0.0
  %479 = vmatmul.mubr.f32.gmra.mrb[0].mxu0 %v160
  %v480 = vpop.f32.mrb[0].mxu0
  %v481 = vadd.f32 %v141, %v480
  %v482 = vpop.f32.mrb[0].mxu0
  %v483 = vadd.f32 %v141, %v482
  %484 = vmatprep.mubr.f32.mxu0 0.0
  %485 = vmatmul.mubr.f32.gmra.mrb[0].mxu0 %v163
  %v486 = vpop.f32.mrb[0].mxu0
  %v487 = vadd.f32 %v146, %v486
  %v488 = vpop.f32.mrb[0].mxu0
  %v489 = vadd.f32 %v146, %v488
  %490 = vmatprep.mubr.f32.mxu0 0.0
  %491 = vmatmul.mubr.f32.gmra.mrb[0].mxu0 %v166
  %v492 = vpop.f32.mrb[0].mxu0
  %v493 = vadd.f32 %v151, %v492
  %v494 = vpop.f32.mrb[0].mxu0
  %v495 = vadd.f32 %v151, %v494
  %496 = vmatprep.mubr.f32.mxu0 0.0
  %497 = vmatmul.mubr.f32.gmra.mrb[0].mxu0 %v169
  %v498 = vpop.f32.mrb[0].mxu0
  %v499 = vadd.f32 %v156, %v498
  %v500 = vpop.f32.mrb[0].mxu0
  %v501 = vadd.f32 %v156, %v500
  %502 = vdwg.mxu0
  %v503 = vxor.u32 %v481, 2147483648
  %v504 = vxor.u32 %v483, 2147483648
  %v505 = vxor.u32 %v487, 2147483648
  %v506 = vxor.u32 %v489, 2147483648
  %v507 = vxor.u32 %v493, 2147483648
  %v508 = vxor.u32 %v495, 2147483648
  %v509 = vxor.u32 %v499, 2147483648
  %v510 = vxor.u32 %v501, 2147483648
  %v511 = vmul.f32 %v503, 1.442695
  %v512 = vpow.pop %v511
  %v513 = vmul.f32 %v504, 1.442695
  %v514 = vpow.pop %v513
  %v515 = vmul.f32 %v505, 1.442695
  %v516 = vpow.pop %v515
  %v517 = vmul.f32 %v506, 1.442695
  %v518 = vpow.pop %v517
  %v519 = vmul.f32 %v507, 1.442695
  %v520 = vpow.pop %v519
  %v521 = vmul.f32 %v508, 1.442695
  %v522 = vpow.pop %v521
  %v523 = vmul.f32 %v509, 1.442695
  %v524 = vpow.pop %v523
  %v525 = vmul.f32 %v510, 1.442695
  %v526 = vpow.pop %v525
  %v527 = vadd.f32 %v512, 1.0
  %v528 = vadd.f32 %v514, 1.0
  %v529 = vadd.f32 %v516, 1.0
  %v530 = vadd.f32 %v518, 1.0
  %v531 = vadd.f32 %v520, 1.0
  %v532 = vadd.f32 %v522, 1.0
  %v533 = vadd.f32 %v524, 1.0
  %v534 = vadd.f32 %v526, 1.0
  %v535 = vrcp.pop %v527
  %v536 = vmul.f32 1.0, %v535
  %v537 = vrcp.pop %v528
  %v538 = vmul.f32 1.0, %v537
  %v539 = vrcp.pop %v529
  %v540 = vmul.f32 1.0, %v539
  %v541 = vrcp.pop %v530
  %v542 = vmul.f32 1.0, %v541
  %v543 = vrcp.pop %v531
  %v544 = vmul.f32 1.0, %v543
  %v545 = vrcp.pop %v532
  %v546 = vmul.f32 1.0, %v545
  %v547 = vrcp.pop %v533
  %v548 = vmul.f32 1.0, %v547
  %v549 = vrcp.pop %v534
  %v550 = vmul.f32 1.0, %v549
  %v551 = vmul.f32 %v536, %v325
  %v552 = vmul.f32 %v538, %v326
  %v553 = vmul.f32 %v540, %v327
  %v554 = vmul.f32 %v542, %v328
  %v555 = vmul.f32 %v544, %v329
  %v556 = vmul.f32 %v546, %v330
  %v557 = vmul.f32 %v548, %v331
  %v558 = vmul.f32 %v550, %v332
  %s559 = scalar_lea.vmem %s5, 64
  %560 = vst [vmem:[%s559] sm:$0xff] %v551
  %561 = vst [vmem:[%s559 + $0x8] sm:$0xff] %v552
  %562 = vst [vmem:[%s559 + $0x10] sm:$0xff] %v553
  %563 = vst [vmem:[%s559 + $0x18] sm:$0xff] %v554
  %564 = vst [vmem:[%s559 + $0x20] sm:$0xff] %v555
  %565 = vst [vmem:[%s559 + $0x28] sm:$0xff] %v556
  %566 = vst [vmem:[%s559 + $0x30] sm:$0xff] %v557
  %567 = vst [vmem:[%s559 + $0x38] sm:$0xff] %v558
  // Predicated region
  $region22: #{feature_att.1} parent=0 // pred_check
    _
  $region23: #{feature_att.1} parent=0 // pred_check_branch
    %569 = sbr.rel (0) target = $region25
  $region24: #{feature_att.1} parent=0 // pred_region
    _
  $region25: #{feature_att.1} parent=0 // pred_fallthru
    _
  // Predicated region
  $region26: #{feature_att.1} parent=0 // pred_check
    _
  $region27: #{feature_att.1} parent=0 // pred_check_branch
    %571 = sbr.rel (0) target = $region29
  $region28: #{feature_att.1} parent=0 // pred_region
    _
  $region29: #{feature_att.1} parent=0 // pred_fallthru
    _

</llo_original>
